<compile_context>
chip_gen: v6e
topology: v6e:2x2x1
jax: 0.10.0
libtpu: 0.0.40
codegen_flags: <defaults>
</compile_context>

<pallas_src>
import functools

import jax
import jax.numpy as jnp
import numpy as np
from jax.experimental import pallas as pl
from jax.experimental.pallas import tpu as pltpu


# ----------------------------- kernel ---------------------------------------


def personal_ai_kernel(x_ref,
                       w1_ref, b1_ref,
                       w2_ref, b2_ref,
                       wh1_ref, bh1_ref,
                       wh2_ref, bh2_ref,
                       heads_ref, feat_ref, *, action_dim):
    f32 = jnp.float32
    cd = w1_ref.dtype                                   # matmul compute dtype (bf16)

    x = x_ref[...]                                      # (TB, input_dim+num_domains) bf16

    # input_processor: Linear -> ReLU -> Dropout(eval=id) -> Linear -> ReLU
    # (domain embedding already folded into w1 / the one-hot lanes of x).
    h1 = jnp.dot(x, w1_ref[...], preferred_element_type=f32) + b1_ref[...]
    h1 = jnp.maximum(h1, 0.0)

    h2 = jnp.dot(h1.astype(cd), w2_ref[...], preferred_element_type=f32) + b2_ref[...]
    feat = jnp.maximum(h2, 0.0)                         # final_features (TB, hidden) f32
    feat_ref[...] = feat

    # Fused heads, first layer: [action | confidence | stress] in one matmul.
    hh = jnp.dot(feat.astype(cd), wh1_ref[...], preferred_element_type=f32) + bh1_ref[...]
    hh = jnp.maximum(hh, 0.0)

    # Fused heads, second layer (block-diagonal, lane-padded to 128).
    # The confidence/stress columns of wh2/bh2 carry a folded 0.5 so that
    # sigmoid(x) = 0.5*tanh(x/2) + 0.5 needs only the single tanh below.
    raw = jnp.dot(hh.astype(cd), wh2_ref[...], preferred_element_type=f32) + bh2_ref[...]
    t = jnp.tanh(raw)                                   # one EUP pass for all heads
    lane = jax.lax.broadcasted_iota(jnp.int32, raw.shape, 1)
    heads = jnp.where(lane < action_dim, t, 0.5 * t + 0.5)
    heads_ref[...] = heads.astype(heads_ref.dtype)      # bf16 store (halves head bytes)


# ----------------------------- wrapper ---------------------------------------


def _round_up(x, m):
    return ((x + m - 1) // m) * m


def personal_ai_forward(context, sequence, domain_id, fused, action_dim,
                        compute_dtype=jnp.bfloat16):
    if sequence.shape[1] > 0:
        # TODO(synk): the reference non-empty sequence branch (2-layer LSTM +
        # MultiheadAttention) concatenates (B,1,hidden) with (B,1,hidden//2) along
        # dim=1, which is shape-inconsistent and raises in PyTorch; only the
        # empty-sequence path exists.
        raise NotImplementedError("non-empty sequence branch is undefined in the reference")

    B, input_dim = context.shape
    num_domains = int(fused["num_domains"])
    hidden_dim = fused["w2"].shape[1]
    heads_pad = fused["wh2"].shape[1]
    x_dim = fused["w1"].shape[0]                          # input_dim + num_domains

    # Batch tiling: cap tile at 1024 rows; force >=2 tiles for mid/large B so the
    # "parallel" axis shards across both v7x TensorCores; pad only to the tile's
    # 16-row sublane multiple (bf16 output packing), not a whole tile.
    CAP = 1024
    num_tiles = max(1, pl.cdiv(B, CAP))
    if B > 256:
        num_tiles = max(num_tiles, 2)
    TILE_B = _round_up(pl.cdiv(B, num_tiles), 16)
    B_pad = num_tiles * TILE_B
    grid = (num_tiles,)

    # Wrapper-side packing: [context | one_hot(domain)] in bf16.
    onehot = jax.nn.one_hot(domain_id.astype(jnp.int32), num_domains,
                            dtype=compute_dtype)
    x = jnp.zeros((B_pad, x_dim), compute_dtype)
    x = x.at[:B, :input_dim].set(context.astype(compute_dtype))
    x = x.at[:B, input_dim:].set(onehot)

    weights = (fused["w1"], fused["b1"],
               fused["w2"], fused["b2"],
               fused["wh1"], fused["bh1"],
               fused["wh2"], fused["bh2"])

    heads, feat = pl.pallas_call(
        functools.partial(personal_ai_kernel, action_dim=action_dim),
        grid=grid,
        in_specs=[pl.BlockSpec((TILE_B, x_dim), lambda i: (i, 0))]
                 + [pl.BlockSpec(w.shape, lambda i: (0, 0)) for w in weights],
        out_specs=(pl.BlockSpec((TILE_B, heads_pad), lambda i: (i, 0)),
                   pl.BlockSpec((TILE_B, hidden_dim), lambda i: (i, 0))),
        out_shape=(jax.ShapeDtypeStruct((B_pad, heads_pad), jnp.bfloat16),
                   jax.ShapeDtypeStruct((B_pad, hidden_dim), jnp.float32)),
        compiler_params=pltpu.CompilerParams(dimension_semantics=("parallel",)),
    )(x, *weights)

    heads = heads[:B].astype(jnp.float32)
    action = heads[:, :action_dim]
    confidence = heads[:, action_dim:action_dim + 1]
    stress = heads[:, action_dim + 1:action_dim + 2]
    features = feat[:B]
    return {"action": action, "confidence": confidence,
            "stress": stress, "features": features}


# --------------------- parameter init / fusion (one-time) --------------------


def _linear(key, fan_in, fan_out):
    # PyTorch nn.Linear default init: U(-1/sqrt(fan_in), 1/sqrt(fan_in)).
    kw, kb = jax.random.split(key)
    bound = 1.0 / (fan_in ** 0.5)
    w = jax.random.uniform(kw, (fan_in, fan_out), jnp.float32, -bound, bound)
    b = jax.random.uniform(kb, (1, fan_out), jnp.float32, -bound, bound)
    return w, b


def init_params(key, context_dim, action_dim, biometric_dim,
                hidden_dim=128, num_domains=7):
    input_dim = context_dim + biometric_dim + context_dim
    keys = jax.random.split(key, 9)

    emb = jax.random.normal(keys[0], (num_domains, 64), jnp.float32)  # Embedding ~ N(0,1)

    w1, b1 = _linear(keys[1], input_dim + 64, hidden_dim)
    w1c, w1e = w1[:input_dim, :], w1[input_dim:, :]                   # split: [context | emb]
    w2, b2 = _linear(keys[2], hidden_dim, hidden_dim)

    wa1, ba1 = _linear(keys[3], hidden_dim, hidden_dim // 2)
    wa2, ba2 = _linear(keys[4], hidden_dim // 2, action_dim)

    wc1, bc1 = _linear(keys[5], hidden_dim, hidden_dim // 4)
    wc2, bc2 = _linear(keys[6], hidden_dim // 4, 1)

    ws1, bs1 = _linear(keys[7], hidden_dim, hidden_dim // 4)
    ws2, bs2 = _linear(keys[8], hidden_dim // 4, 1)

    return dict(emb=emb, w1c=w1c, w1e=w1e, b1=b1, w2=w2, b2=b2,
                wa1=wa1, ba1=ba1, wa2=wa2, ba2=ba2,
                wc1=wc1, bc1=bc1, wc2=wc2, bc2=bc2,
                ws1=ws1, bs1=bs1, ws2=ws2, bs2=bs2)


def prepare_params(params, action_dim, compute_dtype=jnp.bfloat16):
    """One-time algebraic folding / packing of the PyTorch-layout parameters."""
    f32 = jnp.float32
    hidden_dim = params["w2"].shape[1]
    hd2, hd4 = hidden_dim // 2, hidden_dim // 4
    num_domains = params["emb"].shape[0]

    # Fold the embedding table through the embedding columns of layer 1 (f32 fold)
    # and stack it under the context columns -> one (input_dim+num_domains, hidden)
    # weight consumed by a single matmul against [ctx | one_hot(domain)].
    dom_w = params["emb"].astype(f32) @ params["w1e"].astype(f32)     # (num_domains, hidden)
    w1 = jnp.concatenate([params["w1c"].astype(f32), dom_w], axis=0)

    # Fuse the three head first layers into one wide matmul.
    wh1 = jnp.concatenate([params["wa1"], params["wc1"], params["ws1"]], axis=1)
    bh1 = jnp.concatenate([params["ba1"], params["bc1"], params["bs1"]], axis=1)

    # Fuse the three head second layers block-diagonally, lane-padded to >=128.
    # Confidence/stress columns carry a folded 0.5 so the kernel computes
    # sigmoid(x) = 0.5*tanh(x/2) + 0.5 with a single tanh pass.
    heads_in = hd2 + 2 * hd4
    heads_out = action_dim + 2
    heads_pad = max(128, _round_up(heads_out, 128))
    wh2 = jnp.zeros((heads_in, heads_pad), f32)
    wh2 = wh2.at[:hd2, :action_dim].set(params["wa2"])
    wh2 = wh2.at[hd2:hd2 + hd4, action_dim:action_dim + 1].set(0.5 * params["wc2"])
    wh2 = wh2.at[hd2 + hd4:, action_dim + 1:action_dim + 2].set(0.5 * params["ws2"])
    bh2 = jnp.zeros((1, heads_pad), f32)
    bh2 = bh2.at[:, :action_dim].set(params["ba2"])
    bh2 = bh2.at[:, action_dim:action_dim + 1].set(0.5 * params["bc2"])
    bh2 = bh2.at[:, action_dim + 1:action_dim + 2].set(0.5 * params["bs2"])

    cd = compute_dtype
    return dict(
        w1=w1.astype(cd), b1=params["b1"].astype(f32),
        w2=params["w2"].astype(cd), b2=params["b2"].astype(f32),
        wh1=wh1.astype(cd), bh1=bh1.astype(f32),
        wh2=wh2.astype(cd), bh2=bh2.astype(f32),
        num_domains=num_domains,
    )


# ----------------------------- reference -------------------------------------


def reference_forward(context, domain_id, params):
    """Pure-JAX f32 reference of the original (unfused) module, eval-mode dropout."""
    f32 = jnp.float32
    ctx = context.astype(f32)
    emb = params["emb"][domain_id]                                    # (B, 64)
    x = jnp.concatenate([ctx, emb], axis=1)
    w1 = jnp.concatenate([params["w1c"], params["w1e"]], axis=0)
    h1 = jax.nn.relu(x @ w1 + params["b1"])
    feat = jax.nn.relu(h1 @ params["w2"] + params["b2"])
    a1 = jax.nn.relu(feat @ params["wa1"] + params["ba1"])
    action = jnp.tanh(a1 @ params["wa2"] + params["ba2"])
    c1 = jax.nn.relu(feat @ params["wc1"] + params["bc1"])
    conf = jax.nn.sigmoid(c1 @ params["wc2"] + params["bc2"])
    s1 = jax.nn.relu(feat @ params["ws1"] + params["bs1"])
    stress = jax.nn.sigmoid(s1 @ params["ws2"] + params["bs2"])
    return {"action": action, "confidence": conf, "stress": stress, "features": feat}


# ------------------------------- demo ----------------------------------------


if __name__ == "__main__":
    B = 2
    context_dim, biometric_dim, action_dim = 8, 4, 16
    hidden_dim, num_domains = 128, 7
    input_dim = context_dim + biometric_dim + context_dim   # what forward's `context` carries

    key = jax.random.PRNGKey(0)
    k_ctx, k_dom, k_par = jax.random.split(key, 3)

    context = jax.random.normal(k_ctx, (B, input_dim), jnp.float32)
    domain_id = jax.random.randint(k_dom, (B,), 0, num_domains, dtype=jnp.int32)
    # Empty sequence: the only branch of the reference forward that is well-defined.
    sequence = jnp.zeros((B, 0, context_dim + biometric_dim), jnp.float32)

    params = init_params(k_par, context_dim, action_dim, biometric_dim,
                         hidden_dim=hidden_dim, num_domains=num_domains)
    fused = prepare_params(params, action_dim)

    out = personal_ai_forward(context, sequence, domain_id, fused, action_dim)
    jax.block_until_ready(out)

    assert out["action"].shape == (B, action_dim)
    assert out["confidence"].shape == (B, 1)
    assert out["stress"].shape == (B, 1)
    assert out["features"].shape == (B, hidden_dim)

    # Numerics vs the unfused f32 reference (bf16-matmul / bf16-head-store tolerance).
    ref = reference_forward(context, domain_id, params)
    for name in ("action", "confidence", "stress", "features"):
        np.testing.assert_allclose(np.asarray(out[name]), np.asarray(ref[name]),
                                   atol=2e-2, rtol=0.0)

    print("KERNEL_OK")
</pallas_src>

<mosaic_0001>
module attributes {stable_mosaic.version = 11 : i64} {
  func.func @personal_ai_kernel(%arg0: i32, %arg1: memref<16x27xbf16, #tpu.memory_space<vmem>>, %arg2: memref<27x128xbf16, #tpu.memory_space<vmem>>, %arg3: memref<1x128xf32, #tpu.memory_space<vmem>>, %arg4: memref<128x128xbf16, #tpu.memory_space<vmem>>, %arg5: memref<1x128xf32, #tpu.memory_space<vmem>>, %arg6: memref<128x128xbf16, #tpu.memory_space<vmem>>, %arg7: memref<1x128xf32, #tpu.memory_space<vmem>>, %arg8: memref<128x128xbf16, #tpu.memory_space<vmem>>, %arg9: memref<1x128xf32, #tpu.memory_space<vmem>>, %arg10: memref<16x128xbf16, #tpu.memory_space<vmem>>, %arg11: memref<16x128xf32, #tpu.memory_space<vmem>>) attributes {dimension_semantics = [#tpu.dimension_semantics<parallel>], iteration_bounds = array<i64: 1>, scalar_prefetch = 0 : i64, scratch_operands = 0 : i64, tpu.core_type = #tpu.core_type<tc>, window_params = [{transform_indices = @transform_0, window_bounds = array<i64: 16, 27>}, {pipeline_mode = #tpu.pipeline_mode<synchronous>, transform_indices = @transform_1, window_bounds = array<i64: 27, 128>}, {pipeline_mode = #tpu.pipeline_mode<synchronous>, transform_indices = @transform_2, window_bounds = array<i64: 1, 128>}, {pipeline_mode = #tpu.pipeline_mode<synchronous>, transform_indices = @transform_3, window_bounds = array<i64: 128, 128>}, {pipeline_mode = #tpu.pipeline_mode<synchronous>, transform_indices = @transform_4, window_bounds = array<i64: 1, 128>}, {pipeline_mode = #tpu.pipeline_mode<synchronous>, transform_indices = @transform_5, window_bounds = array<i64: 128, 128>}, {pipeline_mode = #tpu.pipeline_mode<synchronous>, transform_indices = @transform_6, window_bounds = array<i64: 1, 128>}, {pipeline_mode = #tpu.pipeline_mode<synchronous>, transform_indices = @transform_7, window_bounds = array<i64: 128, 128>}, {pipeline_mode = #tpu.pipeline_mode<synchronous>, transform_indices = @transform_8, window_bounds = array<i64: 1, 128>}, {transform_indices = @transform_9, window_bounds = array<i64: 16, 128>}, {transform_indices = @transform_10, window_bounds = array<i64: 16, 128>}]} {
    %c0 = arith.constant 0 : index
    %c0_0 = arith.constant 0 : index
    %0 = vector.load %arg1[%c0, %c0_0] : memref<16x27xbf16, #tpu.memory_space<vmem>>, vector<16x27xbf16>
    %c0_1 = arith.constant 0 : index
    %c0_2 = arith.constant 0 : index
    %1 = vector.load %arg2[%c0_1, %c0_2] : memref<27x128xbf16, #tpu.memory_space<vmem>>, vector<27x128xbf16>
    %cst = arith.constant dense<0.000000e+00> : vector<16x128xf32>
    %2 = tpu.matmul %0, %1, %cst {dimension_numbers = #tpu.dot_dimension_numbers<[1], [0], [0], [1], [0, 0, 1, 1], [], []>} : vector<16x27xbf16>, vector<27x128xbf16>, vector<16x128xf32> -> vector<16x128xf32>
    %c0_3 = arith.constant 0 : index
    %c0_4 = arith.constant 0 : index
    %3 = vector.load %arg3[%c0_3, %c0_4] : memref<1x128xf32, #tpu.memory_space<vmem>>, vector<1x128xf32>
    %4 = vector.broadcast %3 : vector<1x128xf32> to vector<16x128xf32>
    %5 = arith.addf %2, %4 : vector<16x128xf32>
    %cst_5 = arith.constant 0.000000e+00 : f32
    %6 = vector.broadcast %cst_5 : f32 to vector<16x128xf32>
    %7 = arith.maximumf %5, %6 : vector<16x128xf32>
    %8 = arith.truncf %7 : vector<16x128xf32> to vector<16x128xbf16>
    %c0_6 = arith.constant 0 : index
    %c0_7 = arith.constant 0 : index
    %9 = vector.load %arg4[%c0_6, %c0_7] : memref<128x128xbf16, #tpu.memory_space<vmem>>, vector<128x128xbf16>
    %cst_8 = arith.constant dense<0.000000e+00> : vector<16x128xf32>
    %10 = tpu.matmul %8, %9, %cst_8 {dimension_numbers = #tpu.dot_dimension_numbers<[1], [0], [0], [1], [0, 0, 1, 1], [], []>} : vector<16x128xbf16>, vector<128x128xbf16>, vector<16x128xf32> -> vector<16x128xf32>
    %c0_9 = arith.constant 0 : index
    %c0_10 = arith.constant 0 : index
    %11 = vector.load %arg5[%c0_9, %c0_10] : memref<1x128xf32, #tpu.memory_space<vmem>>, vector<1x128xf32>
    %12 = vector.broadcast %11 : vector<1x128xf32> to vector<16x128xf32>
    %13 = arith.addf %10, %12 : vector<16x128xf32>
    %cst_11 = arith.constant 0.000000e+00 : f32
    %14 = vector.broadcast %cst_11 : f32 to vector<16x128xf32>
    %15 = arith.maximumf %13, %14 : vector<16x128xf32>
    %c0_12 = arith.constant 0 : index
    %c0_13 = arith.constant 0 : index
    %16 = vector.load %arg11[%c0_12, %c0_13] : memref<16x128xf32, #tpu.memory_space<vmem>>, vector<16x128xf32>
    tpu.vector_store %arg11[%c0_12, %c0_13], %15 {strides = array<i32>} : memref<16x128xf32, #tpu.memory_space<vmem>>, vector<16x128xf32>,
    %17 = arith.truncf %15 : vector<16x128xf32> to vector<16x128xbf16>
    %c0_14 = arith.constant 0 : index
    %c0_15 = arith.constant 0 : index
    %18 = vector.load %arg6[%c0_14, %c0_15] : memref<128x128xbf16, #tpu.memory_space<vmem>>, vector<128x128xbf16>
    %cst_16 = arith.constant dense<0.000000e+00> : vector<16x128xf32>
    %19 = tpu.matmul %17, %18, %cst_16 {dimension_numbers = #tpu.dot_dimension_numbers<[1], [0], [0], [1], [0, 0, 1, 1], [], []>} : vector<16x128xbf16>, vector<128x128xbf16>, vector<16x128xf32> -> vector<16x128xf32>
    %c0_17 = arith.constant 0 : index
    %c0_18 = arith.constant 0 : index
    %20 = vector.load %arg7[%c0_17, %c0_18] : memref<1x128xf32, #tpu.memory_space<vmem>>, vector<1x128xf32>
    %21 = vector.broadcast %20 : vector<1x128xf32> to vector<16x128xf32>
    %22 = arith.addf %19, %21 : vector<16x128xf32>
    %cst_19 = arith.constant 0.000000e+00 : f32
    %23 = vector.broadcast %cst_19 : f32 to vector<16x128xf32>
    %24 = arith.maximumf %22, %23 : vector<16x128xf32>
    %25 = arith.truncf %24 : vector<16x128xf32> to vector<16x128xbf16>
    %c0_20 = arith.constant 0 : index
    %c0_21 = arith.constant 0 : index
    %26 = vector.load %arg8[%c0_20, %c0_21] : memref<128x128xbf16, #tpu.memory_space<vmem>>, vector<128x128xbf16>
    %cst_22 = arith.constant dense<0.000000e+00> : vector<16x128xf32>
    %27 = tpu.matmul %25, %26, %cst_22 {dimension_numbers = #tpu.dot_dimension_numbers<[1], [0], [0], [1], [0, 0, 1, 1], [], []>} : vector<16x128xbf16>, vector<128x128xbf16>, vector<16x128xf32> -> vector<16x128xf32>
    %c0_23 = arith.constant 0 : index
    %c0_24 = arith.constant 0 : index
    %28 = vector.load %arg9[%c0_23, %c0_24] : memref<1x128xf32, #tpu.memory_space<vmem>>, vector<1x128xf32>
    %29 = vector.broadcast %28 : vector<1x128xf32> to vector<16x128xf32>
    %30 = arith.addf %27, %29 : vector<16x128xf32>
    %31 = math.tanh %30 : vector<16x128xf32>
    %32 = tpu.iota {dimensions = array<i32: 1>} : vector<16x128xi32>
    %c16_i32 = arith.constant 16 : i32
    %33 = vector.broadcast %c16_i32 : i32 to vector<16x128xi32>
    %34 = arith.cmpi slt, %32, %33 : vector<16x128xi32>
    %cst_25 = arith.constant 5.000000e-01 : f32
    %35 = vector.broadcast %cst_25 : f32 to vector<16x128xf32>
    %36 = arith.mulf %35, %31 : vector<16x128xf32>
    %cst_26 = arith.constant 5.000000e-01 : f32
    %37 = vector.broadcast %cst_26 : f32 to vector<16x128xf32>
    %38 = arith.addf %36, %37 : vector<16x128xf32>
    %39 = arith.select %34, %31, %38 : vector<16x128xi1>, vector<16x128xf32>
    %40 = arith.truncf %39 : vector<16x128xf32> to vector<16x128xbf16>
    %c0_27 = arith.constant 0 : index
    %c0_28 = arith.constant 0 : index
    %41 = vector.load %arg10[%c0_27, %c0_28] : memref<16x128xbf16, #tpu.memory_space<vmem>>, vector<16x128xbf16>
    tpu.vector_store %arg10[%c0_27, %c0_28], %40 {strides = array<i32>} : memref<16x128xbf16, #tpu.memory_space<vmem>>, vector<16x128xbf16>,
    return
  }
  func.func @transform_0(%arg0: i32) -> (i32, i32) {
    %c0_i32 = arith.constant 0 : i32
    %c0_i32_0 = arith.constant 0 : i32
    return %arg0, %c0_i32 : i32, i32
  }
  func.func @transform_1(%arg0: i32) -> (i32, i32) {
    %c0_i32 = arith.constant 0 : i32
    %c0_i32_0 = arith.constant 0 : i32
    %c0_i32_1 = arith.constant 0 : i32
    return %c0_i32, %c0_i32_0 : i32, i32
  }
  func.func @transform_2(%arg0: i32) -> (i32, i32) {
    %c0_i32 = arith.constant 0 : i32
    %c0_i32_0 = arith.constant 0 : i32
    %c0_i32_1 = arith.constant 0 : i32
    return %c0_i32, %c0_i32_0 : i32, i32
  }
  func.func @transform_3(%arg0: i32) -> (i32, i32) {
    %c0_i32 = arith.constant 0 : i32
    %c0_i32_0 = arith.constant 0 : i32
    %c0_i32_1 = arith.constant 0 : i32
    return %c0_i32, %c0_i32_0 : i32, i32
  }
  func.func @transform_4(%arg0: i32) -> (i32, i32) {
    %c0_i32 = arith.constant 0 : i32
    %c0_i32_0 = arith.constant 0 : i32
    %c0_i32_1 = arith.constant 0 : i32
    return %c0_i32, %c0_i32_0 : i32, i32
  }
  func.func @transform_5(%arg0: i32) -> (i32, i32) {
    %c0_i32 = arith.constant 0 : i32
    %c0_i32_0 = arith.constant 0 : i32
    %c0_i32_1 = arith.constant 0 : i32
    return %c0_i32, %c0_i32_0 : i32, i32
  }
  func.func @transform_6(%arg0: i32) -> (i32, i32) {
    %c0_i32 = arith.constant 0 : i32
    %c0_i32_0 = arith.constant 0 : i32
    %c0_i32_1 = arith.constant 0 : i32
    return %c0_i32, %c0_i32_0 : i32, i32
  }
  func.func @transform_7(%arg0: i32) -> (i32, i32) {
    %c0_i32 = arith.constant 0 : i32
    %c0_i32_0 = arith.constant 0 : i32
    %c0_i32_1 = arith.constant 0 : i32
    return %c0_i32, %c0_i32_0 : i32, i32
  }
  func.func @transform_8(%arg0: i32) -> (i32, i32) {
    %c0_i32 = arith.constant 0 : i32
    %c0_i32_0 = arith.constant 0 : i32
    %c0_i32_1 = arith.constant 0 : i32
    return %c0_i32, %c0_i32_0 : i32, i32
  }
  func.func @transform_9(%arg0: i32) -> (i32, i32) {
    %c0_i32 = arith.constant 0 : i32
    %c0_i32_0 = arith.constant 0 : i32
    return %arg0, %c0_i32 : i32, i32
  }
  func.func @transform_10(%arg0: i32) -> (i32, i32) {
    %c0_i32 = arith.constant 0 : i32
    %c0_i32_0 = arith.constant 0 : i32
    return %arg0, %c0_i32 : i32, i32
  }
}

</mosaic_0001>

<llo_original>
// kernel: tpu_custom_call.1
$region0: #{tpu_custom_call.1}
  #allocation0 [shape = 'u32[]', space=smem, size = 0x4, offset = 0x4, fixed_abs, tag = 'smem constant byte address 0x4 - core index']
  #allocation1 [shape = 'u32[144,128]{1,0:T(1,128)}', space=vmem, size = 0x12000, scoped, tag = 'internal scratch']
  %s0 = inlined_call_operand.hbm [shape: bf16[16,27], index: 0, kind: input, shape index: {}]
  %s1 = inlined_call_operand.hbm [shape: bf16[27,128], index: 1, kind: input, shape index: {}]
  %s2 = inlined_call_operand.vmem [shape: f32[1,128], index: 2, kind: input, shape index: {}]
  %s3 = inlined_call_operand.hbm [shape: bf16[128,128], index: 3, kind: input, shape index: {}]
  %s4 = inlined_call_operand.vmem [shape: f32[1,128], index: 4, kind: input, shape index: {}]
  %s5 = inlined_call_operand.hbm [shape: bf16[128,128], index: 5, kind: input, shape index: {}]
  %s6 = inlined_call_operand.vmem [shape: f32[1,128], index: 6, kind: input, shape index: {}]
  %s7 = inlined_call_operand.hbm [shape: bf16[128,128], index: 7, kind: input, shape index: {}]
  %s8 = inlined_call_operand.vmem [shape: f32[1,128], index: 8, kind: input, shape index: {}]
  %s9 = inlined_call_operand.hbm [shape: bf16[16,128], index: 9, kind: output, shape index: {0}]
  %s10 = inlined_call_operand.hbm [shape: f32[16,128], index: 10, kind: output, shape index: {1}]
  %11 = xla_tuple %s9, %s10
  %s12 = sld [smem:[#allocation0]]
  $region74: #{tpu_custom_call.1} parent=0
    _
  %s14 = ssub.s32 1, %s12
  %s15 = scalar_select 0, %s14, %s12
  $region1: #{tpu_custom_call.1} parent=0
    #allocation2 [shape = 'u8[4096]{0}', space=vmem, size = 0x1000, scoped, tag = 'input window, operand 0, single buffered']
    #allocation3 [shape = 's32[1]{0}', space=sflag, size = 0x4, scoped, tag = 'scoped memory for tpu_custom_call.1']
    #allocation4 [shape = 's32[1]{0}', space=sflag, size = 0x4, scoped, tag = 'scoped memory for tpu_custom_call.1']
    #allocation5 [shape = 'u8[8192]{0}', space=vmem, size = 0x2000, scoped, tag = 'input window, operand 1, single buffered']
    #allocation6 [shape = 's32[1]{0}', space=sflag, size = 0x4, scoped, tag = 'scoped memory for tpu_custom_call.1']
    #allocation7 [shape = 'u8[32768]{0}', space=vmem, size = 0x8000, scoped, tag = 'input window, operand 3, single buffered']
    #allocation8 [shape = 'u8[32768]{0}', space=vmem, size = 0x8000, scoped, tag = 'input window, operand 5, single buffered']
    #allocation9 [shape = 's32[1]{0}', space=sflag, size = 0x4, scoped, tag = 'scoped memory for tpu_custom_call.1']
    #allocation10 [shape = 'u8[32768]{0}', space=vmem, size = 0x8000, scoped, tag = 'input window, operand 7, single buffered']
    #allocation11 [shape = 'u8[4096]{0}', space=vmem, size = 0x1000, scoped, tag = 'output window, operand 0, single buffered']
    #allocation12 [shape = 'u8[8192]{0}', space=vmem, size = 0x2000, scoped, tag = 'output window, operand 1, single buffered']
    #allocation13 [shape = 's32[1]{0}', space=sflag, size = 0x4, scoped, tag = 'scoped memory for tpu_custom_call.1']
    %16 = vsyncpa [#allocation3], 0
    %17 = vsyncpa [#allocation6], 0
    %18 = vsyncpa [#allocation9], 0
    %19 = vsyncpa [#allocation4], 0
    %20 = vsyncpa [#allocation13], 0
    // Predicated region
    $region2: #{tpu_custom_call.1} parent=1 // pred_check
      _
    $region3: #{tpu_custom_call.1} parent=1 // pred_check_branch
      %22 = sbr.rel (0) target = $region5
    $region4: #{tpu_custom_call.1} parent=1 // pred_region
      %s24 = ssub.s32 128, 128
      %25 = vsyncadd [#allocation3], %s24
      %s26 = sshll.u32 [#allocation2], 4
      %s27 = int_to_ptr.vmem [resolvable:$true] %s26
      %32 = dma.hbm_to_vmem [thread:$0]  %s0, 128, %s27, [#allocation3], 64, 64, 4
    $region5: #{tpu_custom_call.1} parent=1 // pred_fallthru
      _
    // Predicated region
    $region6: #{tpu_custom_call.1} parent=1 // pred_check
      _
    $region7: #{tpu_custom_call.1} parent=1 // pred_check_branch
      %34 = sbr.rel (0) target = $region9
    $region8: #{tpu_custom_call.1} parent=1 // pred_region
      %s36 = ssub.s32 256, 256
      %37 = vsyncadd [#allocation6], %s36
      %s38 = sshll.u32 [#allocation5], 4
      %s39 = int_to_ptr.vmem [resolvable:$true] %s38
      %44 = dma.hbm_to_vmem [thread:$0]  %s1, 256, %s39, [#allocation6], 64, 64, 4
    $region9: #{tpu_custom_call.1} parent=1 // pred_fallthru
      _
    // Predicated region
    $region10: #{tpu_custom_call.1} parent=1 // pred_check
      _
    $region11: #{tpu_custom_call.1} parent=1 // pred_check_branch
      %46 = sbr.rel (0) target = $region13
    $region12: #{tpu_custom_call.1} parent=1 // pred_region
      _
    $region13: #{tpu_custom_call.1} parent=1 // pred_fallthru
      _
    // Predicated region
    $region14: #{tpu_custom_call.1} parent=1 // pred_check
      _
    $region15: #{tpu_custom_call.1} parent=1 // pred_check_branch
      %48 = sbr.rel (0) target = $region17
    $region16: #{tpu_custom_call.1} parent=1 // pred_region
      %s50 = ssub.s32 1024, 1024
      %51 = vsyncadd [#allocation6], %s50
      %s52 = sshll.u32 [#allocation7], 4
      %s53 = int_to_ptr.vmem [resolvable:$true] %s52
      %58 = dma.hbm_to_vmem [thread:$0]  %s3, 1024, %s53, [#allocation6], 64, 64, 4
    $region17: #{tpu_custom_call.1} parent=1 // pred_fallthru
      _
    // Predicated region
    $region18: #{tpu_custom_call.1} parent=1 // pred_check
      _
    $region19: #{tpu_custom_call.1} parent=1 // pred_check_branch
      %60 = sbr.rel (0) target = $region21
    $region20: #{tpu_custom_call.1} parent=1 // pred_region
      _
    $region21: #{tpu_custom_call.1} parent=1 // pred_fallthru
      _
    // Predicated region
    $region22: #{tpu_custom_call.1} parent=1 // pred_check
      _
    $region23: #{tpu_custom_call.1} parent=1 // pred_check_branch
      %62 = sbr.rel (0) target = $region25
    $region24: #{tpu_custom_call.1} parent=1 // pred_region
      %s64 = ssub.s32 1024, 1024
      %65 = vsyncadd [#allocation9], %s64
      %s66 = sshll.u32 [#allocation8], 4
      %s67 = int_to_ptr.vmem [resolvable:$true] %s66
      %72 = dma.hbm_to_vmem [thread:$0]  %s5, 1024, %s67, [#allocation9], 64, 64, 4
    $region25: #{tpu_custom_call.1} parent=1 // pred_fallthru
      _
    // Predicated region
    $region26: #{tpu_custom_call.1} parent=1 // pred_check
      _
    $region27: #{tpu_custom_call.1} parent=1 // pred_check_branch
      %74 = sbr.rel (0) target = $region29
    $region28: #{tpu_custom_call.1} parent=1 // pred_region
      _
    $region29: #{tpu_custom_call.1} parent=1 // pred_fallthru
      _
    // Predicated region
    $region30: #{tpu_custom_call.1} parent=1 // pred_check
      _
    $region31: #{tpu_custom_call.1} parent=1 // pred_check_branch
      %76 = sbr.rel (0) target = $region33
    $region32: #{tpu_custom_call.1} parent=1 // pred_region
      %s78 = ssub.s32 1024, 1024
      %79 = vsyncadd [#allocation9], %s78
      %s80 = sshll.u32 [#allocation10], 4
      %s81 = int_to_ptr.vmem [resolvable:$true] %s80
      %86 = dma.hbm_to_vmem [thread:$0]  %s7, 1024, %s81, [#allocation9], 64, 64, 4
    $region33: #{tpu_custom_call.1} parent=1 // pred_fallthru
      _
    // Predicated region
    $region34: #{tpu_custom_call.1} parent=1 // pred_check
      _
    $region35: #{tpu_custom_call.1} parent=1 // pred_check_branch
      %88 = sbr.rel (0) target = $region37
    $region36: #{tpu_custom_call.1} parent=1 // pred_region
      _
    $region37: #{tpu_custom_call.1} parent=1 // pred_fallthru
      _
    // Predicated region
    $region38: #{tpu_custom_call.1} parent=1 // pred_check
      _
    $region39: #{tpu_custom_call.1} parent=1 // pred_check_branch
      %90 = sbr.rel (0) target = $region41
    $region40: #{tpu_custom_call.1} parent=1 // pred_region
      %91 = dma.done [#allocation3], 128
    $region41: #{tpu_custom_call.1} parent=1 // pred_fallthru
      _
    // Predicated region
    $region42: #{tpu_custom_call.1} parent=1 // pred_check
      _
    $region43: #{tpu_custom_call.1} parent=1 // pred_check_branch
      %93 = sbr.rel (0) target = $region45
    $region44: #{tpu_custom_call.1} parent=1 // pred_region
      %94 = dma.done [#allocation6], 256
    $region45: #{tpu_custom_call.1} parent=1 // pred_fallthru
      _
    // Predicated region
    $region46: #{tpu_custom_call.1} parent=1 // pred_check
      _
    $region47: #{tpu_custom_call.1} parent=1 // pred_check_branch
      %96 = sbr.rel (0) target = $region49
    $region48: #{tpu_custom_call.1} parent=1 // pred_region
      %97 = dma.done [#allocation6], 1024
    $region49: #{tpu_custom_call.1} parent=1 // pred_fallthru
      _
    // Predicated region
    $region50: #{tpu_custom_call.1} parent=1 // pred_check
      _
    $region51: #{tpu_custom_call.1} parent=1 // pred_check_branch
      %99 = sbr.rel (0) target = $region53
    $region52: #{tpu_custom_call.1} parent=1 // pred_region
      %100 = dma.done [#allocation9], 1024
    $region53: #{tpu_custom_call.1} parent=1 // pred_fallthru
      _
    // Predicated region
    $region54: #{tpu_custom_call.1} parent=1 // pred_check
      _
    $region55: #{tpu_custom_call.1} parent=1 // pred_check_branch
      %102 = sbr.rel (0) target = $region57
    $region56: #{tpu_custom_call.1} parent=1 // pred_region
      %103 = dma.done [#allocation9], 1024
    $region57: #{tpu_custom_call.1} parent=1 // pred_fallthru
      _
    %v105 = vld [vmem:[#allocation2] sm:$0xf]
    %v106 = vld [vmem:[#allocation2 + $0x4] sm:$0xf]
    %v107 = vld [vmem:[#allocation5] sm:$0xf]
    %v108 = vld [vmem:[#allocation5 + $0x4] sm:$0xf]
    %v109 = vld [vmem:[#allocation5 + $0x8] sm:$0xf]
    %v110 = vld [vmem:[#allocation5 + $0xc] sm:$0x3]
    %v111 = vld [vmem:[%s2] sm:$0x1]
    %v113 = vlaneseq
    %v114 = vshrl.u32 %v113, 7
    %v115 = vsub.s32 0, %v114
    %v116 = vrot.slane %v111, %v115
    %v120 = vunpack.c.l.b16 %v105
    %v121 = vunpack.c.l.b16 %v106
    %v122 = vpack.c.b16 %v121, %v120
    %v127 = vunpack.c.l.b16 %v107
    %v128 = vunpack.c.l.b16 %v108
    %v129 = vunpack.c.l.b16 %v109
    %v130 = vunpack.c.l.b16 %v110
    %v131 = vpack.c.b16 %v128, %v127
    %v132 = vpack.c.b16 %v130, %v129
    %vm134 = vcmask 220160
    %v136 = vsel %vm134, %v122, 0
    %vm138 = vcmask 1044480
    %vm139 = vcmask 1045504
    %v140 = vsel %vm138, 4294967295, 65535
    %v141 = vsel %vm139, %v140, 0
    %v143 = vand.u32 %v132, %v141
    %145 = vmatprep.subr.bf16.mxu0 0
    %146 = vmatpush1.bf16.msra.mxu0 0
    %147 = vmatprep.subr.bf16.mxu0 0
    %148 = vmatpush1.bf16.msra.mxu0 0
    %149 = vmatprep.subr.bf16.mxu0 0
    %150 = vmatpush1.bf16.msra.mxu0 0
    %151 = vmatprep.subr.bf16.mxu0 0
    %152 = vmatpush1.bf16.msra.mxu0 0
    %153 = vmatprep.subr.bf16.mxu0 0
    %154 = vmatpush1.bf16.msra.mxu0 0
    %155 = vmatprep.subr.bf16.mxu0 0
    %156 = vmatpush1.bf16.msra.mxu0 0
    %157 = vmatprep.subr.bf16.mxu0 0
    %158 = vmatpush1.bf16.msra.mxu0 %v143
    %159 = vmatprep.subr.bf16.mxu0 0
    %160 = vmatpush1.bf16.msra.mxu0 %v131
    %161 = vmatprep.subr.bf16.mxu0 0
    %162 = vmatpush2.bf16.msra.mxu0 0
    %163 = vmatprep.subr.bf16.mxu0 0
    %164 = vmatpush2.bf16.msra.mxu0 0
    %165 = vmatprep.subr.bf16.mxu0 0
    %166 = vmatpush2.bf16.msra.mxu0 0
    %167 = vmatprep.subr.bf16.mxu0 0
    %168 = vmatpush2.bf16.msra.mxu0 0
    %169 = vmatprep.subr.bf16.mxu0 0
    %170 = vmatpush2.bf16.msra.mxu0 0
    %171 = vmatprep.subr.bf16.mxu0 0
    %172 = vmatpush2.bf16.msra.mxu0 0
    %173 = vmatprep.subr.bf16.mxu0 0
    %174 = vmatpush2.bf16.msra.mxu0 0
    %175 = vmatprep.subr.bf16.mxu0 0
    %176 = vmatpush2.bf16.msra.mxu0 0
    %177 = vmatprep.mubr.bf16.mxu0 0
    %178 = vmatmul.mubr.bf16.gmra.mxu0 %v136
    %v179 = vpop.f32.mrf.mxu0
    %v180 = vadd.f32 %v116, %v179
    %v181 = vpop.f32.mrf.mxu0
    %v182 = vpop.f32.mrf.mxu0
    %v183 = vadd.f32 %v116, %v182
    %v184 = vpop.f32.mrf.mxu0
    %185 = vdwg.mxu0
    %v186 = vmax.f32 %v180, 0.0
    %v187 = vmax.f32 %v183, 0.0
    %v188 = vpack.c.bf16 %v187, %v186
    %v189 = vld [vmem:[#allocation7] sm:$0xf]
    %v190 = vld [vmem:[#allocation7 + $0x4] sm:$0xf]
    %v191 = vld [vmem:[#allocation7 + $0x8] sm:$0xf]
    %v192 = vld [vmem:[#allocation7 + $0xc] sm:$0xf]
    %v193 = vld [vmem:[#allocation7 + $0x10] sm:$0xf]
    %v194 = vld [vmem:[#allocation7 + $0x14] sm:$0xf]
    %v195 = vld [vmem:[#allocation7 + $0x18] sm:$0xf]
    %v196 = vld [vmem:[#allocation7 + $0x1c] sm:$0xf]
    %v197 = vld [vmem:[#allocation7 + $0x20] sm:$0xf]
    %v198 = vld [vmem:[#allocation7 + $0x24] sm:$0xf]
    %v199 = vld [vmem:[#allocation7 + $0x28] sm:$0xf]
    %v200 = vld [vmem:[#allocation7 + $0x2c] sm:$0xf]
    %v201 = vld [vmem:[#allocation7 + $0x30] sm:$0xf]
    %v202 = vld [vmem:[#allocation7 + $0x34] sm:$0xf]
    %v203 = vld [vmem:[#allocation7 + $0x38] sm:$0xf]
    %v204 = vld [vmem:[#allocation7 + $0x3c] sm:$0xf]
    %v205 = vld [vmem:[%s4] sm:$0x1]
    %v207 = vlaneseq
    %v208 = vshrl.u32 %v207, 7
    %v209 = vsub.s32 0, %v208
    %v210 = vrot.slane %v205, %v209
    %v228 = vunpack.c.l.b16 %v189
    %v229 = vunpack.c.l.b16 %v190
    %v230 = vunpack.c.l.b16 %v191
    %v231 = vunpack.c.l.b16 %v192
    %v232 = vunpack.c.l.b16 %v193
    %v233 = vunpack.c.l.b16 %v194
    %v234 = vunpack.c.l.b16 %v195
    %v235 = vunpack.c.l.b16 %v196
    %v236 = vunpack.c.l.b16 %v197
    %v237 = vunpack.c.l.b16 %v198
    %v238 = vunpack.c.l.b16 %v199
    %v239 = vunpack.c.l.b16 %v200
    %v240 = vunpack.c.l.b16 %v201
    %v241 = vunpack.c.l.b16 %v202
    %v242 = vunpack.c.l.b16 %v203
    %v243 = vunpack.c.l.b16 %v204
    %v244 = vpack.c.b16 %v229, %v228
    %v245 = vpack.c.b16 %v231, %v230
    %v246 = vpack.c.b16 %v233, %v232
    %v247 = vpack.c.b16 %v235, %v234
    %v248 = vpack.c.b16 %v237, %v236
    %v249 = vpack.c.b16 %v239, %v238
    %v250 = vpack.c.b16 %v241, %v240
    %v251 = vpack.c.b16 %v243, %v242
    %260 = vmatprep.subr.bf16.mxu0 0
    %261 = vmatpush1.bf16.msra.mxu0 %v251
    %262 = vmatprep.subr.bf16.mxu0 0
    %263 = vmatpush1.bf16.msra.mxu0 %v250
    %264 = vmatprep.subr.bf16.mxu0 0
    %265 = vmatpush1.bf16.msra.mxu0 %v249
    %266 = vmatprep.subr.bf16.mxu0 0
    %267 = vmatpush1.bf16.msra.mxu0 %v248
    %268 = vmatprep.subr.bf16.mxu0 0
    %269 = vmatpush1.bf16.msra.mxu0 %v247
    %270 = vmatprep.subr.bf16.mxu0 0
    %271 = vmatpush1.bf16.msra.mxu0 %v246
    %272 = vmatprep.subr.bf16.mxu0 0
    %273 = vmatpush1.bf16.msra.mxu0 %v245
    %274 = vmatprep.subr.bf16.mxu0 0
    %275 = vmatpush1.bf16.msra.mxu0 %v244
    %276 = vmatprep.subr.bf16.mxu0 0
    %277 = vmatpush2.bf16.msra.mxu0 0
    %278 = vmatprep.subr.bf16.mxu0 0
    %279 = vmatpush2.bf16.msra.mxu0 0
    %280 = vmatprep.subr.bf16.mxu0 0
    %281 = vmatpush2.bf16.msra.mxu0 0
    %282 = vmatprep.subr.bf16.mxu0 0
    %283 = vmatpush2.bf16.msra.mxu0 0
    %284 = vmatprep.subr.bf16.mxu0 0
    %285 = vmatpush2.bf16.msra.mxu0 0
    %286 = vmatprep.subr.bf16.mxu0 0
    %287 = vmatpush2.bf16.msra.mxu0 0
    %288 = vmatprep.subr.bf16.mxu0 0
    %289 = vmatpush2.bf16.msra.mxu0 0
    %290 = vmatprep.subr.bf16.mxu0 0
    %291 = vmatpush2.bf16.msra.mxu0 0
    %292 = vmatprep.mubr.bf16.mxu0 0
    %293 = vmatmul.mubr.bf16.gmra.mxu0 %v188
    %v294 = vpop.f32.mrf.mxu0
    %v295 = vadd.f32 %v210, %v294
    %v296 = vpop.f32.mrf.mxu0
    %v297 = vpop.f32.mrf.mxu0
    %v298 = vadd.f32 %v210, %v297
    %v299 = vpop.f32.mrf.mxu0
    %300 = vdwg.mxu0
    %v301 = vmax.f32 %v295, 0.0
    %v302 = vmax.f32 %v298, 0.0
    %303 = vst [vmem:[#allocation12] sm:$0xff] %v301
    %304 = vst [vmem:[#allocation12 + $0x8] sm:$0xff] %v302
    %v305 = vpack.c.bf16 %v302, %v301
    %v306 = vld [vmem:[#allocation8] sm:$0xf]
    %v307 = vld [vmem:[#allocation8 + $0x4] sm:$0xf]
    %v308 = vld [vmem:[#allocation8 + $0x8] sm:$0xf]
    %v309 = vld [vmem:[#allocation8 + $0xc] sm:$0xf]
    %v310 = vld [vmem:[#allocation8 + $0x10] sm:$0xf]
    %v311 = vld [vmem:[#allocation8 + $0x14] sm:$0xf]
    %v312 = vld [vmem:[#allocation8 + $0x18] sm:$0xf]
    %v313 = vld [vmem:[#allocation8 + $0x1c] sm:$0xf]
    %v314 = vld [vmem:[#allocation8 + $0x20] sm:$0xf]
    %v315 = vld [vmem:[#allocation8 + $0x24] sm:$0xf]
    %v316 = vld [vmem:[#allocation8 + $0x28] sm:$0xf]
    %v317 = vld [vmem:[#allocation8 + $0x2c] sm:$0xf]
    %v318 = vld [vmem:[#allocation8 + $0x30] sm:$0xf]
    %v319 = vld [vmem:[#allocation8 + $0x34] sm:$0xf]
    %v320 = vld [vmem:[#allocation8 + $0x38] sm:$0xf]
    %v321 = vld [vmem:[#allocation8 + $0x3c] sm:$0xf]
    %v322 = vld [vmem:[%s6] sm:$0x1]
    %v324 = vlaneseq
    %v325 = vshrl.u32 %v324, 7
    %v326 = vsub.s32 0, %v325
    %v327 = vrot.slane %v322, %v326
    %v345 = vunpack.c.l.b16 %v306
    %v346 = vunpack.c.l.b16 %v307
    %v347 = vunpack.c.l.b16 %v308
    %v348 = vunpack.c.l.b16 %v309
    %v349 = vunpack.c.l.b16 %v310
    %v350 = vunpack.c.l.b16 %v311
    %v351 = vunpack.c.l.b16 %v312
    %v352 = vunpack.c.l.b16 %v313
    %v353 = vunpack.c.l.b16 %v314
    %v354 = vunpack.c.l.b16 %v315
    %v355 = vunpack.c.l.b16 %v316
    %v356 = vunpack.c.l.b16 %v317
    %v357 = vunpack.c.l.b16 %v318
    %v358 = vunpack.c.l.b16 %v319
    %v359 = vunpack.c.l.b16 %v320
    %v360 = vunpack.c.l.b16 %v321
    %v361 = vpack.c.b16 %v346, %v345
    %v362 = vpack.c.b16 %v348, %v347
    %v363 = vpack.c.b16 %v350, %v349
    %v364 = vpack.c.b16 %v352, %v351
    %v365 = vpack.c.b16 %v354, %v353
    %v366 = vpack.c.b16 %v356, %v355
    %v367 = vpack.c.b16 %v358, %v357
    %v368 = vpack.c.b16 %v360, %v359
    %377 = vmatprep.subr.bf16.mxu0 0
    %378 = vmatpush1.bf16.msra.mxu0 %v368
    %379 = vmatprep.subr.bf16.mxu0 0
    %380 = vmatpush1.bf16.msra.mxu0 %v367
    %381 = vmatprep.subr.bf16.mxu0 0
    %382 = vmatpush1.bf16.msra.mxu0 %v366
    %383 = vmatprep.subr.bf16.mxu0 0
    %384 = vmatpush1.bf16.msra.mxu0 %v365
    %385 = vmatprep.subr.bf16.mxu0 0
    %386 = vmatpush1.bf16.msra.mxu0 %v364
    %387 = vmatprep.subr.bf16.mxu0 0
    %388 = vmatpush1.bf16.msra.mxu0 %v363
    %389 = vmatprep.subr.bf16.mxu0 0
    %390 = vmatpush1.bf16.msra.mxu0 %v362
    %391 = vmatprep.subr.bf16.mxu0 0
    %392 = vmatpush1.bf16.msra.mxu0 %v361
    %393 = vmatprep.subr.bf16.mxu0 0
    %394 = vmatpush2.bf16.msra.mxu0 0
    %395 = vmatprep.subr.bf16.mxu0 0
    %396 = vmatpush2.bf16.msra.mxu0 0
    %397 = vmatprep.subr.bf16.mxu0 0
    %398 = vmatpush2.bf16.msra.mxu0 0
    %399 = vmatprep.subr.bf16.mxu0 0
    %400 = vmatpush2.bf16.msra.mxu0 0
    %401 = vmatprep.subr.bf16.mxu0 0
    %402 = vmatpush2.bf16.msra.mxu0 0
    %403 = vmatprep.subr.bf16.mxu0 0
    %404 = vmatpush2.bf16.msra.mxu0 0
    %405 = vmatprep.subr.bf16.mxu0 0
    %406 = vmatpush2.bf16.msra.mxu0 0
    %407 = vmatprep.subr.bf16.mxu0 0
    %408 = vmatpush2.bf16.msra.mxu0 0
    %409 = vmatprep.mubr.bf16.mxu0 0
    %410 = vmatmul.mubr.bf16.gmra.mxu0 %v305
    %v411 = vpop.f32.mrf.mxu0
    %v412 = vadd.f32 %v327, %v411
    %v413 = vpop.f32.mrf.mxu0
    %v414 = vpop.f32.mrf.mxu0
    %v415 = vadd.f32 %v327, %v414
    %v416 = vpop.f32.mrf.mxu0
    %417 = vdwg.mxu0
    %v418 = vmax.f32 %v412, 0.0
    %v419 = vmax.f32 %v415, 0.0
    %v420 = vpack.c.bf16 %v419, %v418
    %v421 = vld [vmem:[#allocation10] sm:$0xf]
    %v422 = vld [vmem:[#allocation10 + $0x4] sm:$0xf]
    %v423 = vld [vmem:[#allocation10 + $0x8] sm:$0xf]
    %v424 = vld [vmem:[#allocation10 + $0xc] sm:$0xf]
    %v425 = vld [vmem:[#allocation10 + $0x10] sm:$0xf]
    %v426 = vld [vmem:[#allocation10 + $0x14] sm:$0xf]
    %v427 = vld [vmem:[#allocation10 + $0x18] sm:$0xf]
    %v428 = vld [vmem:[#allocation10 + $0x1c] sm:$0xf]
    %v429 = vld [vmem:[#allocation10 + $0x20] sm:$0xf]
    %v430 = vld [vmem:[#allocation10 + $0x24] sm:$0xf]
    %v431 = vld [vmem:[#allocation10 + $0x28] sm:$0xf]
    %v432 = vld [vmem:[#allocation10 + $0x2c] sm:$0xf]
    %v433 = vld [vmem:[#allocation10 + $0x30] sm:$0xf]
    %v434 = vld [vmem:[#allocation10 + $0x34] sm:$0xf]
    %v435 = vld [vmem:[#allocation10 + $0x38] sm:$0xf]
    %v436 = vld [vmem:[#allocation10 + $0x3c] sm:$0xf]
    %v437 = vld [vmem:[%s8] sm:$0x1]
    %v439 = vlaneseq
    %v440 = vshrl.u32 %v439, 7
    %v441 = vsub.s32 0, %v440
    %v442 = vrot.slane %v437, %v441
    %v460 = vunpack.c.l.b16 %v421
    %v461 = vunpack.c.l.b16 %v422
    %v462 = vunpack.c.l.b16 %v423
    %v463 = vunpack.c.l.b16 %v424
    %v464 = vunpack.c.l.b16 %v425
    %v465 = vunpack.c.l.b16 %v426
    %v466 = vunpack.c.l.b16 %v427
    %v467 = vunpack.c.l.b16 %v428
    %v468 = vunpack.c.l.b16 %v429
    %v469 = vunpack.c.l.b16 %v430
    %v470 = vunpack.c.l.b16 %v431
    %v471 = vunpack.c.l.b16 %v432
    %v472 = vunpack.c.l.b16 %v433
    %v473 = vunpack.c.l.b16 %v434
    %v474 = vunpack.c.l.b16 %v435
    %v475 = vunpack.c.l.b16 %v436
    %v476 = vpack.c.b16 %v461, %v460
    %v477 = vpack.c.b16 %v463, %v462
    %v478 = vpack.c.b16 %v465, %v464
    %v479 = vpack.c.b16 %v467, %v466
    %v480 = vpack.c.b16 %v469, %v468
    %v481 = vpack.c.b16 %v471, %v470
    %v482 = vpack.c.b16 %v473, %v472
    %v483 = vpack.c.b16 %v475, %v474
    %492 = vmatprep.subr.bf16.mxu0 0
    %493 = vmatpush1.bf16.msra.mxu0 %v483
    %494 = vmatprep.subr.bf16.mxu0 0
    %495 = vmatpush1.bf16.msra.mxu0 %v482
    %496 = vmatprep.subr.bf16.mxu0 0
    %497 = vmatpush1.bf16.msra.mxu0 %v481
    %498 = vmatprep.subr.bf16.mxu0 0
    %499 = vmatpush1.bf16.msra.mxu0 %v480
    %500 = vmatprep.subr.bf16.mxu0 0
    %501 = vmatpush1.bf16.msra.mxu0 %v479
    %502 = vmatprep.subr.bf16.mxu0 0
    %503 = vmatpush1.bf16.msra.mxu0 %v478
    %504 = vmatprep.subr.bf16.mxu0 0
    %505 = vmatpush1.bf16.msra.mxu0 %v477
    %506 = vmatprep.subr.bf16.mxu0 0
    %507 = vmatpush1.bf16.msra.mxu0 %v476
    %508 = vmatprep.subr.bf16.mxu0 0
    %509 = vmatpush2.bf16.msra.mxu0 0
    %510 = vmatprep.subr.bf16.mxu0 0
    %511 = vmatpush2.bf16.msra.mxu0 0
    %512 = vmatprep.subr.bf16.mxu0 0
    %513 = vmatpush2.bf16.msra.mxu0 0
    %514 = vmatprep.subr.bf16.mxu0 0
    %515 = vmatpush2.bf16.msra.mxu0 0
    %516 = vmatprep.subr.bf16.mxu0 0
    %517 = vmatpush2.bf16.msra.mxu0 0
    %518 = vmatprep.subr.bf16.mxu0 0
    %519 = vmatpush2.bf16.msra.mxu0 0
    %520 = vmatprep.subr.bf16.mxu0 0
    %521 = vmatpush2.bf16.msra.mxu0 0
    %522 = vmatprep.subr.bf16.mxu0 0
    %523 = vmatpush2.bf16.msra.mxu0 0
    %524 = vmatprep.mubr.bf16.mxu0 0
    %525 = vmatmul.mubr.bf16.gmra.mxu0 %v420
    %v526 = vpop.f32.mrf.mxu0
    %v527 = vadd.f32 %v442, %v526
    %v528 = vpop.f32.mrf.mxu0
    %v529 = vpop.f32.mrf.mxu0
    %v530 = vadd.f32 %v442, %v529
    %v531 = vpop.f32.mrf.mxu0
    %532 = vdwg.mxu0
    %v533 = vtanh.pop %v527
    %v534 = vtanh.pop %v530
    %v535 = vlaneseq
    %v536 = vand.u32 %v535, 127
    %vm537 = vcmp.lt.s32.totalorder %v536, 16
    %v538 = vmul.f32 %v533, 0.5
    %v539 = vmul.f32 %v534, 0.5
    %v540 = vadd.f32 %v538, 0.5
    %v541 = vadd.f32 %v539, 0.5
    %v542 = vsel %vm537, %v533, %v540
    %v543 = vsel %vm537, %v534, %v541
    %v544 = vpack.c.bf16 %v543, %v542
    %v546 = vunpack.c.l.b16 %v544
    %v547 = vunpack.c.h.b16 %v544
    %v548 = vpack.c.b16 %v546, %v546
    %v549 = vpack.c.b16 %v547, %v547
    %552 = vst [vmem:[#allocation11] sm:$0xf] %v548
    %553 = vst [vmem:[#allocation11 + $0x4] sm:$0xf] %v549
    // Predicated region
    $region58: #{tpu_custom_call.1} parent=1 // pred_check
      _
    $region59: #{tpu_custom_call.1} parent=1 // pred_check_branch
      %555 = sbr.rel (0) target = $region61
    $region60: #{tpu_custom_call.1} parent=1 // pred_region
      %s557 = ssub.s32 128, 128
      %558 = vsyncadd [#allocation4], %s557
      %s559 = sshll.u32 [#allocation11], 4
      %s560 = int_to_ptr.vmem [resolvable:$true] %s559
      %565 = dma.vmem_to_hbm [thread:$0]  %s560, 128, %s9, [#allocation4], 64, 64, 4
    $region61: #{tpu_custom_call.1} parent=1 // pred_fallthru
      _
    // Predicated region
    $region62: #{tpu_custom_call.1} parent=1 // pred_check
      _
    $region63: #{tpu_custom_call.1} parent=1 // pred_check_branch
      %567 = sbr.rel (0) target = $region65
    $region64: #{tpu_custom_call.1} parent=1 // pred_region
      %s569 = ssub.s32 256, 256
      %570 = vsyncadd [#allocation13], %s569
      %s571 = sshll.u32 [#allocation12], 4
      %s572 = int_to_ptr.vmem [resolvable:$true] %s571
      %577 = dma.vmem_to_hbm [thread:$0]  %s572, 256, %s10, [#allocation13], 128, 128, 8
    $region65: #{tpu_custom_call.1} parent=1 // pred_fallthru
      _
    // Predicated region
    $region66: #{tpu_custom_call.1} parent=1 // pred_check
      _
    $region67: #{tpu_custom_call.1} parent=1 // pred_check_branch
      %579 = sbr.rel (0) target = $region69
    $region68: #{tpu_custom_call.1} parent=1 // pred_region
      %580 = dma.done [#allocation4], 128
    $region69: #{tpu_custom_call.1} parent=1 // pred_fallthru
      _
    // Predicated region
    $region70: #{tpu_custom_call.1} parent=1 // pred_check
      _
    $region71: #{tpu_custom_call.1} parent=1 // pred_check_branch
      %582 = sbr.rel (0) target = $region73
    $region72: #{tpu_custom_call.1} parent=1 // pred_region
      %583 = dma.done [#allocation13], 256
    $region73: #{tpu_custom_call.1} parent=1 // pred_fallthru
      _
    %584 = vsyncpa [#allocation3], 1
    %585 = vsyncpa [#allocation6], 1
    %586 = vsyncpa [#allocation9], 1
    %587 = vsyncpa [#allocation4], 1
    %588 = vsyncpa [#allocation13], 1

</llo_original>
